<compile_context>
chip_gen: v5e
topology: v5e:2x2
jax: 0.10.0
libtpu: 0.0.40
codegen_flags: <defaults>
</compile_context>

<pallas_src>
import jax
import jax.numpy as jnp
import numpy as np
from jax import lax
from jax.experimental import pallas as pl
from jax.experimental.pallas import tpu as pltpu


# ---------------------------------------------------------------------------
# Stage 1: adaLN modulation  --  shift, scale = Linear(SiLU(c)).chunk(2, dim=1)
# ---------------------------------------------------------------------------
def _adaln_kernel(c_ref, w_ref, b_ref, shift_ref, scale_ref):
    c = c_ref[...].astype(jnp.float32)                      # (B, D)
    silu_c = c * (1.0 / (1.0 + jnp.exp(-c)))                # SiLU
    ada = jnp.dot(silu_c.astype(w_ref.dtype), w_ref[...],
                  preferred_element_type=jnp.float32)       # (B, 2D), f32 acc
    ada = ada + b_ref[...].astype(jnp.float32)
    D = shift_ref.shape[-1]
    shift_ref[...] = ada[:, :D].astype(shift_ref.dtype)
    scale_ref[...] = ada[:, D:2 * D].astype(scale_ref.dtype)


def _adaln_modulation(c, w_ada, b_ada):
    B, D = c.shape
    # Whole arrays fit trivially in VMEM; no grid needed for this tiny op.
    return pl.pallas_call(
        _adaln_kernel,
        out_shape=(jax.ShapeDtypeStruct((B, D), jnp.float32),
                   jax.ShapeDtypeStruct((B, D), jnp.float32)),
    )(c, w_ada, b_ada)


# ---------------------------------------------------------------------------
# Stage 2: y = modulate(LayerNorm(x), shift, scale) @ W + b   (token-tiled)
# ---------------------------------------------------------------------------
def _final_layer_kernel(shift_ref, scale_ref, x_ref, w_ref, b_ref, o_ref):
    x = x_ref[0].astype(jnp.float32)                        # (TILE_N, D)
    shift = shift_ref[...]                                  # (1, D) f32
    scale = scale_ref[...]                                  # (1, D) f32

    # LayerNorm (elementwise_affine=False, eps=1e-6)
    mean = jnp.mean(x, axis=-1, keepdims=True)
    xc = x - mean
    var = jnp.mean(xc * xc, axis=-1, keepdims=True)
    xn = xc * lax.rsqrt(var + 1e-6)

    xm = xn * (1.0 + scale) + shift                         # modulate

    # Final projection on the MXU: bf16 operands, f32 accumulation.
    y = jnp.dot(xm.astype(w_ref.dtype), w_ref[...],
                preferred_element_type=jnp.float32)         # (TILE_N, O)
    y = y + b_ref[...].astype(jnp.float32)
    o_ref[0] = y.astype(o_ref.dtype)


def _choose_tile_n(N):
    for t in (512, 256, 128, 64, 32, 16, 8):
        if N % t == 0:
            return t
    return N  # block equals full axis -> always a legal BlockSpec


def final_layer_pallas(x, c, params):
    B, N, D = x.shape
    w_ada, b_ada = params["w_ada"], params["b_ada"]
    w_lin, b_lin = params["w_lin"], params["b_lin"]
    O = w_lin.shape[1]

    # Fail loudly on inconsistent shapes instead of miscompiling the tiling.
    assert c.shape == (B, D), f"c must be {(B, D)}, got {c.shape}"
    assert w_ada.shape == (D, 2 * D) and b_ada.shape == (1, 2 * D)
    assert w_lin.shape == (D, O) and b_lin.shape == (1, O)

    shift, scale = _adaln_modulation(c, w_ada, b_ada)

    tile_n = _choose_tile_n(N)
    assert N % tile_n == 0
    grid = (B, N // tile_n)

    # Explicit VMEM budget: double-buffered activation blocks + resident
    # weight/bias (counted double-buffered to be conservative) + 2x headroom.
    act_bytes = tile_n * D * 4 + tile_n * O * 4 + 2 * D * 4
    wgt_bytes = D * O * w_lin.dtype.itemsize + O * 4
    vmem_bytes = int(min(96 * 1024 * 1024,
                         max(4 * 1024 * 1024, 2 * (2 * act_bytes + 2 * wgt_bytes))))

    in_specs = [
        pl.BlockSpec((1, D), lambda b, n: (b, 0)),              # shift (per batch)
        pl.BlockSpec((1, D), lambda b, n: (b, 0)),              # scale (per batch)
        pl.BlockSpec((1, tile_n, D), lambda b, n: (b, n, 0)),   # x token tile
        pl.BlockSpec((D, O), lambda b, n: (0, 0)),              # W: constant index -> fetched once
        pl.BlockSpec((1, O), lambda b, n: (0, 0)),              # bias
    ]
    out_spec = pl.BlockSpec((1, tile_n, O), lambda b, n: (b, n, 0))

    return pl.pallas_call(
        _final_layer_kernel,
        out_shape=jax.ShapeDtypeStruct((B, N, O), x.dtype),
        grid_spec=pltpu.PrefetchScalarGridSpec(
            num_scalar_prefetch=0,
            grid=grid,
            in_specs=in_specs,
            out_specs=out_spec,
        ),
        compiler_params=pltpu.CompilerParams(
            dimension_semantics=("parallel", "parallel"),
            vmem_limit_bytes=vmem_bytes),
    )(shift, scale, x, w_lin, b_lin)


# ---------------------------------------------------------------------------
# Pure-JAX reference mirroring the PyTorch forward (same bf16 matmul operands,
# f32 accumulation, so the comparison isolates kernel correctness).
# ---------------------------------------------------------------------------
def final_layer_reference(x, c, params):
    D = x.shape[-1]
    silu_c = c * jax.nn.sigmoid(c)
    ada = jnp.dot(silu_c.astype(params["w_ada"].dtype), params["w_ada"],
                  preferred_element_type=jnp.float32) + params["b_ada"]
    shift, scale = ada[:, :D], ada[:, D:]

    mean = x.mean(-1, keepdims=True)
    xc = x - mean
    var = (xc * xc).mean(-1, keepdims=True)
    xn = xc * lax.rsqrt(var + 1e-6)
    xm = xn * (1.0 + scale[:, None, :]) + shift[:, None, :]

    y = jnp.dot(xm.astype(params["w_lin"].dtype), params["w_lin"],
                preferred_element_type=jnp.float32) + params["b_lin"]
    return y.astype(x.dtype)


def init_params(key, embed_dim, patch_size, out_channels):
    D = embed_dim
    O = patch_size * patch_size * out_channels
    ks = jax.random.split(key, 4)
    n = lambda k, shape, dt: (0.02 * jax.random.normal(k, shape)).astype(dt)
    return {
        # adaLN linear: D -> 2D (weights bf16 for the MXU, biases f32)
        "w_ada": n(ks[0], (D, 2 * D), jnp.bfloat16),
        "b_ada": n(ks[1], (1, 2 * D), jnp.float32),
        # final projection: D -> patch_size^2 * out_channels
        "w_lin": n(ks[2], (D, O), jnp.bfloat16),
        "b_lin": n(ks[3], (1, O), jnp.float32),
    }


if __name__ == "__main__":
    B, N = 2, 16                      # batch, tokens
    embed_dim = 128                   # lane-aligned hidden size D
    patch_size, out_channels = 4, 8   # O = 4*4*8 = 128 -> lane-dense output stores

    key = jax.random.PRNGKey(0)
    kx, kc, kp = jax.random.split(key, 3)
    x = jax.random.normal(kx, (B, N, embed_dim), dtype=jnp.float32)
    c = jax.random.normal(kc, (B, embed_dim), dtype=jnp.float32)
    params = init_params(kp, embed_dim, patch_size, out_channels)

    out = final_layer_pallas(x, c, params)
    out = jax.block_until_ready(out)

    ref = jax.block_until_ready(final_layer_reference(x, c, params))
    np.testing.assert_allclose(np.asarray(out, dtype=np.float32),
                               np.asarray(ref, dtype=np.float32),
                               rtol=1e-2, atol=1e-2)
    print("KERNEL_OK")
</pallas_src>

<mosaic_0001>
module attributes {stable_mosaic.version = 11 : i64} {
  func.func @_adaln_kernel(%arg0: memref<2x128xf32, #tpu.memory_space<vmem>>, %arg1: memref<128x256xbf16, #tpu.memory_space<vmem>>, %arg2: memref<1x256xf32, #tpu.memory_space<vmem>>, %arg3: memref<2x128xf32, #tpu.memory_space<vmem>>, %arg4: memref<2x128xf32, #tpu.memory_space<vmem>>) attributes {dimension_semantics = [], scalar_prefetch = 0 : i64, scratch_operands = 0 : i64, tpu.core_type = #tpu.core_type<tc>} {
    %c0 = arith.constant 0 : index
    %c0_0 = arith.constant 0 : index
    %0 = vector.load %arg0[%c0, %c0_0] : memref<2x128xf32, #tpu.memory_space<vmem>>, vector<2x128xf32>
    %cst = arith.constant 0.000000e+00 : f32
    %1 = vector.broadcast %cst : f32 to vector<2x128xf32>
    %2 = arith.subf %1, %0 : vector<2x128xf32>
    %3 = math.exp %2 : vector<2x128xf32>
    %cst_1 = arith.constant 1.000000e+00 : f32
    %4 = vector.broadcast %cst_1 : f32 to vector<2x128xf32>
    %5 = arith.addf %4, %3 : vector<2x128xf32>
    %cst_2 = arith.constant 1.000000e+00 : f32
    %6 = vector.broadcast %cst_2 : f32 to vector<2x128xf32>
    %7 = arith.divf %6, %5 : vector<2x128xf32>
    %8 = arith.mulf %0, %7 : vector<2x128xf32>
    %9 = arith.truncf %8 : vector<2x128xf32> to vector<2x128xbf16>
    %c0_3 = arith.constant 0 : index
    %c0_4 = arith.constant 0 : index
    %10 = vector.load %arg1[%c0_3, %c0_4] : memref<128x256xbf16, #tpu.memory_space<vmem>>, vector<128x256xbf16>
    %cst_5 = arith.constant dense<0.000000e+00> : vector<2x256xf32>
    %11 = tpu.matmul %9, %10, %cst_5 {dimension_numbers = #tpu.dot_dimension_numbers<[1], [0], [0], [1], [0, 0, 1, 1], [], []>} : vector<2x128xbf16>, vector<128x256xbf16>, vector<2x256xf32> -> vector<2x256xf32>
    %c0_6 = arith.constant 0 : index
    %c0_7 = arith.constant 0 : index
    %12 = vector.load %arg2[%c0_6, %c0_7] : memref<1x256xf32, #tpu.memory_space<vmem>>, vector<1x256xf32>
    %13 = vector.broadcast %12 : vector<1x256xf32> to vector<2x256xf32>
    %14 = arith.addf %11, %13 : vector<2x256xf32>
    %15 = vector.extract_strided_slice %14 {offsets = [0, 0], sizes = [2, 128], strides = [1, 1]} : vector<2x256xf32> to vector<2x128xf32>
    %c0_8 = arith.constant 0 : index
    %c0_9 = arith.constant 0 : index
    %16 = vector.load %arg3[%c0_8, %c0_9] : memref<2x128xf32, #tpu.memory_space<vmem>>, vector<2x128xf32>
    tpu.vector_store %arg3[%c0_8, %c0_9], %15 {strides = array<i32>} : memref<2x128xf32, #tpu.memory_space<vmem>>, vector<2x128xf32>,
    %17 = vector.extract_strided_slice %14 {offsets = [0, 128], sizes = [2, 128], strides = [1, 1]} : vector<2x256xf32> to vector<2x128xf32>
    %c0_10 = arith.constant 0 : index
    %c0_11 = arith.constant 0 : index
    %18 = vector.load %arg4[%c0_10, %c0_11] : memref<2x128xf32, #tpu.memory_space<vmem>>, vector<2x128xf32>
    tpu.vector_store %arg4[%c0_10, %c0_11], %17 {strides = array<i32>} : memref<2x128xf32, #tpu.memory_space<vmem>>, vector<2x128xf32>,
    return
  }
}

</mosaic_0001>

<llo_original>
// kernel: tpu_custom_call.1
$region0: #{tpu_custom_call.1}
  #allocation0 [shape = 'u32[]', space=smem, size = 0x4, offset = 0x4, fixed_abs, tag = 'smem constant byte address 0x4 - core index']
  #allocation1 [shape = 'u32[72,128]{1,0:T(1,128)}', space=vmem, size = 0x9000, scoped, tag = 'internal scratch']
  %s0 = inlined_call_operand.hbm [shape: f32[2,128], index: 0, kind: input, shape index: {}]
  %s1 = inlined_call_operand.hbm [shape: bf16[128,256], index: 1, kind: input, shape index: {}]
  %s2 = inlined_call_operand.hbm [shape: f32[1,256], index: 2, kind: input, shape index: {}]
  %s3 = inlined_call_operand.hbm [shape: f32[2,128], index: 3, kind: output, shape index: {0}]
  %s4 = inlined_call_operand.hbm [shape: f32[2,128], index: 4, kind: output, shape index: {1}]
  %5 = xla_tuple %s3, %s4
  %s6 = sld [smem:[#allocation0]]
  $region42: #{tpu_custom_call.1} parent=0
    _
  %s8 = ssub.s32 1, %s6
  %s9 = scalar_select 0, %s8, %s6
  $region1: #{tpu_custom_call.1} parent=0
    #allocation2 [shape = 'u8[1024]{0}', space=vmem, size = 0x400, scoped, tag = 'input window, operand 0, single buffered']
    #allocation3 [shape = 's32[1]{0}', space=sflag, size = 0x4, scoped, tag = 'scoped memory for tpu_custom_call.1']
    #allocation4 [shape = 's32[1]{0}', space=sflag, size = 0x4, scoped, tag = 'scoped memory for tpu_custom_call.1']
    #allocation5 [shape = 'u8[65536]{0}', space=vmem, size = 0x10000, scoped, tag = 'input window, operand 1, single buffered']
    #allocation6 [shape = 's32[1]{0}', space=sflag, size = 0x4, scoped, tag = 'scoped memory for tpu_custom_call.1']
    #allocation7 [shape = 'u8[1024]{0}', space=vmem, size = 0x400, scoped, tag = 'input window, operand 2, single buffered']
    #allocation8 [shape = 'u8[1024]{0}', space=vmem, size = 0x400, scoped, tag = 'output window, operand 0, single buffered']
    #allocation9 [shape = 'u8[1024]{0}', space=vmem, size = 0x400, scoped, tag = 'output window, operand 1, single buffered']
    #allocation10 [shape = 's32[1]{0}', space=sflag, size = 0x4, scoped, tag = 'scoped memory for tpu_custom_call.1']
    %10 = vsyncpa [#allocation3], 0
    %11 = vsyncpa [#allocation6], 0
    %12 = vsyncpa [#allocation4], 0
    %13 = vsyncpa [#allocation10], 0
    // Predicated region
    $region2: #{tpu_custom_call.1} parent=1 // pred_check
      _
    $region3: #{tpu_custom_call.1} parent=1 // pred_check_branch
      %15 = sbr.rel (0) target = $region5
    $region4: #{tpu_custom_call.1} parent=1 // pred_region
      %17 = vsyncadd [#allocation3], 0
      %s19 = sshll.u32 %s0, 4
      %s20 = int_to_ptr.hbm [resolvable:$true] %s19
      %s21 = sshll.u32 [#allocation2], 4
      %s22 = int_to_ptr.vmem [resolvable:$true] %s21
      %24 = dma.hbm_to_vmem [thread:$0]  %s20, 32, %s22, [#allocation3]
    $region5: #{tpu_custom_call.1} parent=1 // pred_fallthru
      _
    // Predicated region
    $region6: #{tpu_custom_call.1} parent=1 // pred_check
      _
    $region7: #{tpu_custom_call.1} parent=1 // pred_check_branch
      %26 = sbr.rel (0) target = $region9
    $region8: #{tpu_custom_call.1} parent=1 // pred_region
      %28 = vsyncadd [#allocation6], 0
      %s29 = sshll.u32 %s1, 4
      %s30 = int_to_ptr.hbm [resolvable:$true] %s29
      %s31 = sshll.u32 [#allocation5], 4
      %s32 = int_to_ptr.vmem [resolvable:$true] %s31
      %37 = dma.hbm_to_vmem [thread:$0]  %s30, 2048, %s32, [#allocation6], 128, 128, 8
    $region9: #{tpu_custom_call.1} parent=1 // pred_fallthru
      _
    // Predicated region
    $region10: #{tpu_custom_call.1} parent=1 // pred_check
      _
    $region11: #{tpu_custom_call.1} parent=1 // pred_check_branch
      %39 = sbr.rel (0) target = $region13
    $region12: #{tpu_custom_call.1} parent=1 // pred_region
      %41 = vsyncadd [#allocation6], 0
      %s43 = sshll.u32 %s2, 4
      %s44 = int_to_ptr.hbm [resolvable:$true] %s43
      %s45 = sshll.u32 [#allocation7], 4
      %s46 = int_to_ptr.vmem [resolvable:$true] %s45
      %48 = dma.hbm_to_vmem [thread:$0]  %s44, 32, %s46, [#allocation6]
    $region13: #{tpu_custom_call.1} parent=1 // pred_fallthru
      _
    // Predicated region
    $region14: #{tpu_custom_call.1} parent=1 // pred_check
      _
    $region15: #{tpu_custom_call.1} parent=1 // pred_check_branch
      %50 = sbr.rel (0) target = $region17
    $region16: #{tpu_custom_call.1} parent=1 // pred_region
      %52 = dma.done [#allocation3], 32
    $region17: #{tpu_custom_call.1} parent=1 // pred_fallthru
      _
    // Predicated region
    $region18: #{tpu_custom_call.1} parent=1 // pred_check
      _
    $region19: #{tpu_custom_call.1} parent=1 // pred_check_branch
      %54 = sbr.rel (0) target = $region21
    $region20: #{tpu_custom_call.1} parent=1 // pred_region
      %56 = dma.done [#allocation6], 2048
    $region21: #{tpu_custom_call.1} parent=1 // pred_fallthru
      _
    // Predicated region
    $region22: #{tpu_custom_call.1} parent=1 // pred_check
      _
    $region23: #{tpu_custom_call.1} parent=1 // pred_check_branch
      %58 = sbr.rel (0) target = $region25
    $region24: #{tpu_custom_call.1} parent=1 // pred_region
      %60 = dma.done [#allocation6], 32
    $region25: #{tpu_custom_call.1} parent=1 // pred_fallthru
      _
    %v61 = vld [vmem:[#allocation2] sm:$0x3]
    %v62 = vsub.f32 0.0, %v61
    %v63 = vmul.f32 %v62, 1.442695
    %v64 = vpow.pop %v63
    %v65 = vadd.f32 %v64, 1.0
    %v66 = vrcp.pop %v65
    %v67 = vmul.f32 %v65, %v66
    %v68 = vsub.f32 1.0, %v67
    %v69 = vmul.f32 %v66, %v68
    %v70 = vadd.f32 %v66, %v69
    %vm71 = vweird.f32 %v65
    %vm72 = vweird.f32 %v66
    %vm73 = vmor %vm71, %vm72
    %v74 = vsel %vm73, %v66, %v70
    %v75 = vand.u32 2147483647, %v65
    %vm76 = vcmp.eq.f32.partialorder %v75, 8.507059e+37
    %v77 = vand.u32 %v65, 2147483648
    %v78 = vor.u32 1.1754944e-38, %v77
    %v79 = vsel %vm76, %v78, %v74
    %v80 = vmul.f32 1.0, %v79
    %v81 = vmul.f32 %v61, %v80
    %v82 = vpack.c.bf16 %v81, %v81
    %v83 = vld [vmem:[#allocation5] sm:$0xff]
    %v84 = vld [vmem:[#allocation5 + $0x8] sm:$0xff]
    %v85 = vld [vmem:[#allocation5 + $0x10] sm:$0xff]
    %v86 = vld [vmem:[#allocation5 + $0x18] sm:$0xff]
    %v87 = vld [vmem:[#allocation5 + $0x20] sm:$0xff]
    %v88 = vld [vmem:[#allocation5 + $0x28] sm:$0xff]
    %v89 = vld [vmem:[#allocation5 + $0x30] sm:$0xff]
    %v90 = vld [vmem:[#allocation5 + $0x38] sm:$0xff]
    %v91 = vld [vmem:[#allocation5 + $0x40] sm:$0xff]
    %v92 = vld [vmem:[#allocation5 + $0x48] sm:$0xff]
    %v93 = vld [vmem:[#allocation5 + $0x50] sm:$0xff]
    %v94 = vld [vmem:[#allocation5 + $0x58] sm:$0xff]
    %v95 = vld [vmem:[#allocation5 + $0x60] sm:$0xff]
    %v96 = vld [vmem:[#allocation5 + $0x68] sm:$0xff]
    %v97 = vld [vmem:[#allocation5 + $0x70] sm:$0xff]
    %v98 = vld [vmem:[#allocation5 + $0x78] sm:$0xff]
    %v99 = vld [vmem:[#allocation7] sm:$0x3]
    %v101 = vperm.slane %v99, 0
    %v102 = vperm.slane %v99, 1
    %v121 = vunpack.c.l.b16 %v83
    %v122 = vunpack.c.h.b16 %v83
    %v123 = vunpack.c.l.b16 %v84
    %v124 = vunpack.c.h.b16 %v84
    %v125 = vunpack.c.l.b16 %v85
    %v126 = vunpack.c.h.b16 %v85
    %v127 = vunpack.c.l.b16 %v86
    %v128 = vunpack.c.h.b16 %v86
    %v129 = vunpack.c.l.b16 %v87
    %v130 = vunpack.c.h.b16 %v87
    %v131 = vunpack.c.l.b16 %v88
    %v132 = vunpack.c.h.b16 %v88
    %v133 = vunpack.c.l.b16 %v89
    %v134 = vunpack.c.h.b16 %v89
    %v135 = vunpack.c.l.b16 %v90
    %v136 = vunpack.c.h.b16 %v90
    %v137 = vunpack.c.l.b16 %v91
    %v138 = vunpack.c.h.b16 %v91
    %v139 = vunpack.c.l.b16 %v92
    %v140 = vunpack.c.h.b16 %v92
    %v141 = vunpack.c.l.b16 %v93
    %v142 = vunpack.c.h.b16 %v93
    %v143 = vunpack.c.l.b16 %v94
    %v144 = vunpack.c.h.b16 %v94
    %v145 = vunpack.c.l.b16 %v95
    %v146 = vunpack.c.h.b16 %v95
    %v147 = vunpack.c.l.b16 %v96
    %v148 = vunpack.c.h.b16 %v96
    %v149 = vunpack.c.l.b16 %v97
    %v150 = vunpack.c.h.b16 %v97
    %v151 = vunpack.c.l.b16 %v98
    %v152 = vunpack.c.h.b16 %v98
    %v153 = vpack.c.b16 %v123, %v121
    %v154 = vpack.c.b16 %v124, %v122
    %v155 = vpack.c.b16 %v127, %v125
    %v156 = vpack.c.b16 %v128, %v126
    %v157 = vpack.c.b16 %v131, %v129
    %v158 = vpack.c.b16 %v132, %v130
    %v159 = vpack.c.b16 %v135, %v133
    %v160 = vpack.c.b16 %v136, %v134
    %v161 = vpack.c.b16 %v139, %v137
    %v162 = vpack.c.b16 %v140, %v138
    %v163 = vpack.c.b16 %v143, %v141
    %v164 = vpack.c.b16 %v144, %v142
    %v165 = vpack.c.b16 %v147, %v145
    %v166 = vpack.c.b16 %v148, %v146
    %v167 = vpack.c.b16 %v151, %v149
    %v168 = vpack.c.b16 %v152, %v150
    %185 = vmatpush.bf16.msra.mxu0 %v167
    %186 = vmatpush.bf16.msra.mxu0 %v165
    %187 = vmatpush.bf16.msra.mxu0 %v163
    %188 = vmatpush.bf16.msra.mxu0 %v161
    %189 = vmatpush.bf16.msra.mxu0 %v159
    %190 = vmatpush.bf16.msra.mxu0 %v157
    %191 = vmatpush.bf16.msra.mxu0 %v155
    %192 = vmatpush.bf16.msra.mxu0 %v153
    %193 = vmatmul.bf16.gmra.mxu0 %v82
    %v194 = vpop.f32.mrf.mxu0
    %v195 = vadd.f32 %v101, %v194
    %v196 = vpop.f32.mrf.mxu0
    %197 = vdwg.mxu0
    %198 = vmatpush.bf16.msra.mxu0 %v168
    %199 = vmatpush.bf16.msra.mxu0 %v166
    %200 = vmatpush.bf16.msra.mxu0 %v164
    %201 = vmatpush.bf16.msra.mxu0 %v162
    %202 = vmatpush.bf16.msra.mxu0 %v160
    %203 = vmatpush.bf16.msra.mxu0 %v158
    %204 = vmatpush.bf16.msra.mxu0 %v156
    %205 = vmatpush.bf16.msra.mxu0 %v154
    %206 = vmatmul.bf16.gmra.mxu0 %v82
    %v207 = vpop.f32.mrf.mxu0
    %v208 = vadd.f32 %v102, %v207
    %v209 = vpop.f32.mrf.mxu0
    %210 = vdwg.mxu0
    %211 = vst [vmem:[#allocation8] sm:$0x3] %v195
    %212 = vst [vmem:[#allocation9] sm:$0x3] %v208
    // Predicated region
    $region26: #{tpu_custom_call.1} parent=1 // pred_check
      _
    $region27: #{tpu_custom_call.1} parent=1 // pred_check_branch
      %214 = sbr.rel (0) target = $region29
    $region28: #{tpu_custom_call.1} parent=1 // pred_region
      %216 = vsyncadd [#allocation4], 0
      %s218 = sshll.u32 [#allocation8], 4
      %s219 = int_to_ptr.vmem [resolvable:$true] %s218
      %s220 = sshll.u32 %s3, 4
      %s221 = int_to_ptr.hbm [resolvable:$true] %s220
      %223 = dma.vmem_to_hbm [thread:$0]  %s219, 32, %s221, [#allocation4]
    $region29: #{tpu_custom_call.1} parent=1 // pred_fallthru
      _
    // Predicated region
    $region30: #{tpu_custom_call.1} parent=1 // pred_check
      _
    $region31: #{tpu_custom_call.1} parent=1 // pred_check_branch
      %225 = sbr.rel (0) target = $region33
    $region32: #{tpu_custom_call.1} parent=1 // pred_region
      %227 = vsyncadd [#allocation10], 0
      %s229 = sshll.u32 [#allocation9], 4
      %s230 = int_to_ptr.vmem [resolvable:$true] %s229
      %s231 = sshll.u32 %s4, 4
      %s232 = int_to_ptr.hbm [resolvable:$true] %s231
      %234 = dma.vmem_to_hbm [thread:$0]  %s230, 32, %s232, [#allocation10]
    $region33: #{tpu_custom_call.1} parent=1 // pred_fallthru
      _
    // Predicated region
    $region34: #{tpu_custom_call.1} parent=1 // pred_check
      _
    $region35: #{tpu_custom_call.1} parent=1 // pred_check_branch
      %236 = sbr.rel (0) target = $region37
    $region36: #{tpu_custom_call.1} parent=1 // pred_region
      %238 = dma.done [#allocation4], 32
    $region37: #{tpu_custom_call.1} parent=1 // pred_fallthru
      _
    // Predicated region
    $region38: #{tpu_custom_call.1} parent=1 // pred_check
      _
    $region39: #{tpu_custom_call.1} parent=1 // pred_check_branch
      %240 = sbr.rel (0) target = $region41
    $region40: #{tpu_custom_call.1} parent=1 // pred_region
      %242 = dma.done [#allocation10], 32
    $region41: #{tpu_custom_call.1} parent=1 // pred_fallthru
      _
    %243 = vsyncpa [#allocation3], 1
    %244 = vsyncpa [#allocation6], 1
    %245 = vsyncpa [#allocation4], 1
    %246 = vsyncpa [#allocation10], 1

</llo_original>
